<compile_context>
chip_gen: v7x
topology: tpu7x:2x2x1
jax: 0.10.0
libtpu: 0.0.40
codegen_flags: <defaults>
</compile_context>

<pallas_src>
import functools

import jax
import jax.numpy as jnp
from jax.experimental import pallas as pl
from jax.experimental.pallas import tpu as pltpu

HIDDEN = 64          # logical hidden width of the PyTorch module
HIDDEN_PAD = 128     # zero-padded to a full 128-lane vreg / MXU tile
LEAKY_SLOPE = 0.01


def _leaky_relu(x, slope=LEAKY_SLOPE):
    return jnp.where(x > 0, x, slope * x)


def _round_up(x, m):
    return ((x + m - 1) // m) * m


def _mlp_kernel(x_ref, w1_ref, b1_ref, w2_ref, b2_ref, w3_ref, b3_ref, o_ref,
                *, lane_dense_out):
    # x_ref: (tile_b, in_dim)   w1: (in_dim, 128)   w2: (128, 128)
    # lane_dense_out: w3 is (1, 128) (= W3^T), o_ref is (1, 1, tile_b)
    # otherwise:      w3 is (128, out_dim),     o_ref is (tile_b, out_dim)
    x = x_ref[...]

    h1 = jnp.dot(x, w1_ref[...], preferred_element_type=jnp.float32) + b1_ref[...]
    h1 = _leaky_relu(h1).astype(w2_ref.dtype)

    h2 = jnp.dot(h1, w2_ref[...], preferred_element_type=jnp.float32) + b2_ref[...]
    h2 = _leaky_relu(h2).astype(w3_ref.dtype)

    if lane_dense_out:
        # (1, H) contracted with (tile_b, H) on H  ->  (1, tile_b):
        # batch ends up on the lane axis, so the store is a dense row instead
        # of tile_b masked single-lane stores (out_dim == 1 case).
        out = jax.lax.dot_general(
            w3_ref[...], h2,
            dimension_numbers=(((1,), (1,)), ((), ())),
            preferred_element_type=jnp.float32,
        ) + b3_ref[...]
        o_ref[...] = out[None].astype(o_ref.dtype)          # (1, 1, tile_b)
    else:
        out = jnp.dot(h2, w3_ref[...], preferred_element_type=jnp.float32) + b3_ref[...]
        o_ref[...] = out.astype(o_ref.dtype)                 # (tile_b, out_dim)


@functools.partial(jax.jit, static_argnames=("max_tile_b", "compute_dtype"))
def feedforward_crit(obs, params, *, max_tile_b=1024, compute_dtype=jnp.float32):
    """Forward pass of FeedForwardNN_crit.

    obs:    [B, in_dim] float32 (pass bf16 directly to avoid an extra cast pass
            when compute_dtype=jnp.bfloat16)
    params: dict with w1 [in_dim,64], b1 [64], w2 [64,64], b2 [64],
            w3 [64,out_dim], b3 [out_dim]
    returns [B, out_dim] float32
    """
    w1, b1 = params["w1"], params["b1"]
    w2, b2 = params["w2"], params["b2"]
    w3, b3 = params["w3"], params["b3"]

    B, in_dim = obs.shape
    out_dim = w3.shape[1]
    cdt = compute_dtype

    # Zero-pad hidden width 64 -> 128: dense vreg lanes + full MXU tiles.
    # Zero columns/rows + zero bias keep the math exactly equivalent
    # (leaky_relu(0) == 0, and padded weights/rows contribute 0 downstream).
    hp = HIDDEN_PAD - HIDDEN
    w1p = jnp.pad(w1, ((0, 0), (0, hp))).astype(cdt)
    b1p = jnp.pad(b1, (0, hp)).reshape(1, HIDDEN_PAD).astype(jnp.float32)
    w2p = jnp.pad(w2, ((0, hp), (0, hp))).astype(cdt)
    b2p = jnp.pad(b2, (0, hp)).reshape(1, HIDDEN_PAD).astype(jnp.float32)
    w3p = jnp.pad(w3, ((0, hp), (0, 0))).astype(cdt)
    b3p = b3.reshape(1, out_dim).astype(jnp.float32)

    x = obs.astype(cdt)  # no-op when the caller already supplies compute_dtype

    # Batch tile: as large as the batch allows (capped), multiple of 8 sublanes.
    # 2 buffers x tile_b x in_dim x 4B stays far below the scoped-VMEM limits
    # (16 MiB v5e / 32 MiB v6e,v7x) for any realistic critic in_dim; for very
    # wide observations raise vmem_limit_bytes and re-derive against 64 MiB
    # physical VMEM on v7x.
    tile_b = min(int(max_tile_b), _round_up(B, 8))
    tile_b = _round_up(tile_b, 8)
    num_tiles = pl.cdiv(B, tile_b)

    lane_dense_out = (out_dim == 1)
    kernel = functools.partial(_mlp_kernel, lane_dense_out=lane_dense_out)

    in_specs = [
        pl.BlockSpec((tile_b, in_dim), lambda i: (i, 0)),          # obs tile
        pl.BlockSpec((in_dim, HIDDEN_PAD), lambda i: (0, 0)),      # w1 (resident)
        pl.BlockSpec((1, HIDDEN_PAD), lambda i: (0, 0)),           # b1
        pl.BlockSpec((HIDDEN_PAD, HIDDEN_PAD), lambda i: (0, 0)),  # w2
        pl.BlockSpec((1, HIDDEN_PAD), lambda i: (0, 0)),           # b2
    ]

    if lane_dense_out:
        w3_arg = w3p.T                                             # (1, HIDDEN_PAD)
        in_specs += [
            pl.BlockSpec((1, HIDDEN_PAD), lambda i: (0, 0)),       # w3^T
            pl.BlockSpec((1, 1), lambda i: (0, 0)),                # b3
        ]
        out_shape = jax.ShapeDtypeStruct((num_tiles, 1, tile_b), jnp.float32)
        out_spec = pl.BlockSpec((1, 1, tile_b), lambda i: (i, 0, 0))
    else:
        w3_arg = w3p                                               # (HIDDEN_PAD, out_dim)
        in_specs += [
            pl.BlockSpec((HIDDEN_PAD, out_dim), lambda i: (0, 0)),
            pl.BlockSpec((1, out_dim), lambda i: (0, 0)),
        ]
        out_shape = jax.ShapeDtypeStruct((B, out_dim), jnp.float32)
        out_spec = pl.BlockSpec((tile_b, out_dim), lambda i: (i, 0))

    out = pl.pallas_call(
        kernel,
        out_shape=out_shape,
        grid_spec=pltpu.PrefetchScalarGridSpec(
            num_scalar_prefetch=0,
            grid=(num_tiles,),
            in_specs=in_specs,
            out_specs=out_spec,
        ),
        compiler_params=pltpu.CompilerParams(
            dimension_semantics=("parallel",),
        ),
    )(x, w1p, b1p, w2p, b2p, w3_arg, b3p)

    if lane_dense_out:
        out = out.reshape(num_tiles * tile_b)[:B].reshape(B, 1)
    return out


def init_params(key, in_dim, out_dim):
    """Mimics nn.Linear's U(-1/sqrt(fan_in), 1/sqrt(fan_in)) init.

    Weights are stored as [fan_in, fan_out] (transposed vs. PyTorch) so the
    kernel computes x @ W + b.
    """
    keys = jax.random.split(key, 6)

    def linear(kw, kb, fan_in, fan_out):
        bound = 1.0 / jnp.sqrt(jnp.float32(fan_in))
        w = jax.random.uniform(kw, (fan_in, fan_out), jnp.float32, -bound, bound)
        b = jax.random.uniform(kb, (fan_out,), jnp.float32, -bound, bound)
        return w, b

    w1, b1 = linear(keys[0], keys[1], in_dim, HIDDEN)
    w2, b2 = linear(keys[2], keys[3], HIDDEN, HIDDEN)
    w3, b3 = linear(keys[4], keys[5], HIDDEN, out_dim)
    return {"w1": w1, "b1": b1, "w2": w2, "b2": b2, "w3": w3, "b3": b3}


def _reference(obs, params):
    h1 = _leaky_relu(obs @ params["w1"] + params["b1"])
    h2 = _leaky_relu(h1 @ params["w2"] + params["b2"])
    return h2 @ params["w3"] + params["b3"]


if __name__ == "__main__":
    key = jax.random.PRNGKey(0)
    k_obs, k_params, k_obs2, k_params2 = jax.random.split(key, 4)

    # Case 1: canonical centralized-critic shapes (out_dim=1, lane-dense path).
    batch, in_dim, out_dim = 8, 16, 1
    obs = jax.random.normal(k_obs, (batch, in_dim), dtype=jnp.float32)
    params = init_params(k_params, in_dim, out_dim)
    out = jax.block_until_ready(feedforward_crit(obs, params))
    ref = _reference(obs, params)
    assert out.shape == (batch, out_dim)
    assert jnp.allclose(out, ref, atol=1e-4, rtol=1e-4), "case1 mismatch"

    # Case 2: ragged larger batch -> multi-tile grid, partial last block, no pad.
    batch2 = 300
    obs2 = jax.random.normal(k_obs2, (batch2, in_dim), dtype=jnp.float32)
    out2 = jax.block_until_ready(feedforward_crit(obs2, params, max_tile_b=128))
    ref2 = _reference(obs2, params)
    assert out2.shape == (batch2, out_dim)
    assert jnp.allclose(out2, ref2, atol=1e-4, rtol=1e-4), "case2 mismatch"

    # Case 3: general out_dim > 1 path (standard (B, out_dim) output layout).
    params3 = init_params(k_params2, in_dim, 4)
    out3 = jax.block_until_ready(feedforward_crit(obs2, params3, max_tile_b=128))
    ref3 = _reference(obs2, params3)
    assert out3.shape == (batch2, 4)
    assert jnp.allclose(out3, ref3, atol=1e-4, rtol=1e-4), "case3 mismatch"

    # Case 4: bf16 matmul inputs (HBM-bandwidth lever); f32 accumulation.
    out4 = jax.block_until_ready(
        feedforward_crit(obs2, params, max_tile_b=128, compute_dtype=jnp.bfloat16))
    assert jnp.allclose(out4, ref2, atol=5e-2, rtol=5e-2), "case4 (bf16) mismatch"

    print("KERNEL_OK")
</pallas_src>

<mosaic_0001>
module attributes {stable_mosaic.version = 11 : i64} {
  func.func @_mlp_kernel(%arg0: i32, %arg1: memref<8x16xf32, #tpu.memory_space<vmem>>, %arg2: memref<16x128xf32, #tpu.memory_space<vmem>>, %arg3: memref<1x128xf32, #tpu.memory_space<vmem>>, %arg4: memref<128x128xf32, #tpu.memory_space<vmem>>, %arg5: memref<1x128xf32, #tpu.memory_space<vmem>>, %arg6: memref<1x128xf32, #tpu.memory_space<vmem>>, %arg7: memref<1x1xf32, #tpu.memory_space<vmem>>, %arg8: memref<1x1x8xf32, #tpu.memory_space<vmem>>) attributes {dimension_semantics = [#tpu.dimension_semantics<parallel>], iteration_bounds = array<i64: 1>, scalar_prefetch = 0 : i64, scratch_operands = 0 : i64, tpu.core_type = #tpu.core_type<tc>, window_params = [{transform_indices = @transform_0, window_bounds = array<i64: 8, 16>}, {pipeline_mode = #tpu.pipeline_mode<synchronous>, transform_indices = @transform_1, window_bounds = array<i64: 16, 128>}, {pipeline_mode = #tpu.pipeline_mode<synchronous>, transform_indices = @transform_2, window_bounds = array<i64: 1, 128>}, {pipeline_mode = #tpu.pipeline_mode<synchronous>, transform_indices = @transform_3, window_bounds = array<i64: 128, 128>}, {pipeline_mode = #tpu.pipeline_mode<synchronous>, transform_indices = @transform_4, window_bounds = array<i64: 1, 128>}, {pipeline_mode = #tpu.pipeline_mode<synchronous>, transform_indices = @transform_5, window_bounds = array<i64: 1, 128>}, {pipeline_mode = #tpu.pipeline_mode<synchronous>, transform_indices = @transform_6, window_bounds = array<i64: 1, 1>}, {transform_indices = @transform_7, window_bounds = array<i64: 1, 1, 8>}]} {
    %c0 = arith.constant 0 : index
    %c0_0 = arith.constant 0 : index
    %0 = vector.load %arg1[%c0, %c0_0] : memref<8x16xf32, #tpu.memory_space<vmem>>, vector<8x16xf32>
    %c0_1 = arith.constant 0 : index
    %c0_2 = arith.constant 0 : index
    %1 = vector.load %arg2[%c0_1, %c0_2] : memref<16x128xf32, #tpu.memory_space<vmem>>, vector<16x128xf32>
    %cst = arith.constant dense<0.000000e+00> : vector<8x128xf32>
    %2 = tpu.matmul %0, %1, %cst {dimension_numbers = #tpu.dot_dimension_numbers<[1], [0], [0], [1], [0, 0, 1, 1], [], []>} : vector<8x16xf32>, vector<16x128xf32>, vector<8x128xf32> -> vector<8x128xf32>
    %c0_3 = arith.constant 0 : index
    %c0_4 = arith.constant 0 : index
    %3 = vector.load %arg3[%c0_3, %c0_4] : memref<1x128xf32, #tpu.memory_space<vmem>>, vector<1x128xf32>
    %4 = vector.broadcast %3 : vector<1x128xf32> to vector<8x128xf32>
    %5 = arith.addf %2, %4 : vector<8x128xf32>
    %cst_5 = arith.constant 0.000000e+00 : f32
    %6 = vector.broadcast %cst_5 : f32 to vector<8x128xf32>
    %7 = arith.cmpf ogt, %5, %6 : vector<8x128xf32>
    %cst_6 = arith.constant 0.00999999977 : f32
    %8 = vector.broadcast %cst_6 : f32 to vector<8x128xf32>
    %9 = arith.mulf %8, %5 : vector<8x128xf32>
    %10 = arith.select %7, %5, %9 : vector<8x128xi1>, vector<8x128xf32>
    %c0_7 = arith.constant 0 : index
    %c0_8 = arith.constant 0 : index
    %11 = vector.load %arg4[%c0_7, %c0_8] : memref<128x128xf32, #tpu.memory_space<vmem>>, vector<128x128xf32>
    %cst_9 = arith.constant dense<0.000000e+00> : vector<8x128xf32>
    %12 = tpu.matmul %10, %11, %cst_9 {dimension_numbers = #tpu.dot_dimension_numbers<[1], [0], [0], [1], [0, 0, 1, 1], [], []>} : vector<8x128xf32>, vector<128x128xf32>, vector<8x128xf32> -> vector<8x128xf32>
    %c0_10 = arith.constant 0 : index
    %c0_11 = arith.constant 0 : index
    %13 = vector.load %arg5[%c0_10, %c0_11] : memref<1x128xf32, #tpu.memory_space<vmem>>, vector<1x128xf32>
    %14 = vector.broadcast %13 : vector<1x128xf32> to vector<8x128xf32>
    %15 = arith.addf %12, %14 : vector<8x128xf32>
    %cst_12 = arith.constant 0.000000e+00 : f32
    %16 = vector.broadcast %cst_12 : f32 to vector<8x128xf32>
    %17 = arith.cmpf ogt, %15, %16 : vector<8x128xf32>
    %cst_13 = arith.constant 0.00999999977 : f32
    %18 = vector.broadcast %cst_13 : f32 to vector<8x128xf32>
    %19 = arith.mulf %18, %15 : vector<8x128xf32>
    %20 = arith.select %17, %15, %19 : vector<8x128xi1>, vector<8x128xf32>
    %c0_14 = arith.constant 0 : index
    %c0_15 = arith.constant 0 : index
    %21 = vector.load %arg6[%c0_14, %c0_15] : memref<1x128xf32, #tpu.memory_space<vmem>>, vector<1x128xf32>
    %cst_16 = arith.constant dense<0.000000e+00> : vector<1x8xf32>
    %22 = tpu.matmul %21, %20, %cst_16 {dimension_numbers = #tpu.dot_dimension_numbers<[1], [1], [0], [0], [0, 0, 1, 0], [], []>} : vector<1x128xf32>, vector<8x128xf32>, vector<1x8xf32> -> vector<1x8xf32>
    %c0_17 = arith.constant 0 : index
    %c0_18 = arith.constant 0 : index
    %23 = vector.load %arg7[%c0_17, %c0_18] : memref<1x1xf32, #tpu.memory_space<vmem>>, vector<1x1xf32>
    %24 = vector.broadcast %23 : vector<1x1xf32> to vector<1x8xf32>
    %25 = arith.addf %22, %24 : vector<1x8xf32>
    %26 = vector.shape_cast %25 : vector<1x8xf32> to vector<1x1x8xf32>
    %c0_19 = arith.constant 0 : index
    %c0_20 = arith.constant 0 : index
    %c0_21 = arith.constant 0 : index
    %27 = vector.load %arg8[%c0_19, %c0_20, %c0_21] : memref<1x1x8xf32, #tpu.memory_space<vmem>>, vector<1x1x8xf32>
    tpu.vector_store %arg8[%c0_19, %c0_20, %c0_21], %26 {strides = array<i32>} : memref<1x1x8xf32, #tpu.memory_space<vmem>>, vector<1x1x8xf32>,
    return
  }
  func.func @transform_0(%arg0: i32) -> (i32, i32) {
    %c0_i32 = arith.constant 0 : i32
    %c0_i32_0 = arith.constant 0 : i32
    return %arg0, %c0_i32 : i32, i32
  }
  func.func @transform_1(%arg0: i32) -> (i32, i32) {
    %c0_i32 = arith.constant 0 : i32
    %c0_i32_0 = arith.constant 0 : i32
    %c0_i32_1 = arith.constant 0 : i32
    return %c0_i32, %c0_i32_0 : i32, i32
  }
  func.func @transform_2(%arg0: i32) -> (i32, i32) {
    %c0_i32 = arith.constant 0 : i32
    %c0_i32_0 = arith.constant 0 : i32
    %c0_i32_1 = arith.constant 0 : i32
    return %c0_i32, %c0_i32_0 : i32, i32
  }
  func.func @transform_3(%arg0: i32) -> (i32, i32) {
    %c0_i32 = arith.constant 0 : i32
    %c0_i32_0 = arith.constant 0 : i32
    %c0_i32_1 = arith.constant 0 : i32
    return %c0_i32, %c0_i32_0 : i32, i32
  }
  func.func @transform_4(%arg0: i32) -> (i32, i32) {
    %c0_i32 = arith.constant 0 : i32
    %c0_i32_0 = arith.constant 0 : i32
    %c0_i32_1 = arith.constant 0 : i32
    return %c0_i32, %c0_i32_0 : i32, i32
  }
  func.func @transform_5(%arg0: i32) -> (i32, i32) {
    %c0_i32 = arith.constant 0 : i32
    %c0_i32_0 = arith.constant 0 : i32
    %c0_i32_1 = arith.constant 0 : i32
    return %c0_i32, %c0_i32_0 : i32, i32
  }
  func.func @transform_6(%arg0: i32) -> (i32, i32) {
    %c0_i32 = arith.constant 0 : i32
    %c0_i32_0 = arith.constant 0 : i32
    %c0_i32_1 = arith.constant 0 : i32
    return %c0_i32, %c0_i32_0 : i32, i32
  }
  func.func @transform_7(%arg0: i32) -> (i32, i32, i32) {
    %c0_i32 = arith.constant 0 : i32
    %c0_i32_0 = arith.constant 0 : i32
    %c0_i32_1 = arith.constant 0 : i32
    return %arg0, %c0_i32, %c0_i32_0 : i32, i32, i32
  }
}

</mosaic_0001>

<llo_original>
// kernel: feedforward_crit.1
$region0: #{feedforward_crit.1}
  #allocation0 [shape = 'u32[]', space=smem, size = 0x4, offset = 0x4, fixed_abs, tag = 'smem constant byte address 0x4 - core index']
  #allocation1 [shape = 'u32[144,128]{1,0:T(1,128)}', space=vmem, size = 0x12000, scoped, tag = 'internal scratch']
  #allocation2 [shape = 'f32[1,1]{1,0:T(1,128)S(1)}', space=vmem, size = 0x200, scoped, tag = 'scoped memory for feedforward_crit.1']
  %s0 = inlined_call_operand.vmem [shape: f32[8,16], index: 0, kind: input, shape index: {}]
  %s1 = inlined_call_operand.vmem [shape: f32[16,128], index: 1, kind: input, shape index: {}]
  %s2 = inlined_call_operand.vmem [shape: f32[1,128], index: 2, kind: input, shape index: {}]
  %s3 = inlined_call_operand.vmem [shape: f32[128,128], index: 3, kind: input, shape index: {}]
  %s4 = inlined_call_operand.vmem [shape: f32[1,128], index: 4, kind: input, shape index: {}]
  %s5 = inlined_call_operand.vmem [shape: f32[1,128], index: 5, kind: input, shape index: {}]
  %s6 = inlined_call_operand.<no memory space> [shape: f32[1,1], index: 6, kind: input, shape index: {}]
  %s7 = inlined_call_operand.hbm [shape: f32[1,1,8], index: 7, kind: output, shape index: {}]
  %s8 = sld [smem:[#allocation0]]
  $region38: #{feedforward_crit.1} parent=0
    _
  %s10 = ssub.s32 1, %s8
  %s11 = scalar_select 0, %s10, %s8
  %v12 = vstv %s6
  %13 = vst [vmem:[#allocation2] sm:$0x1] %v12
  $region1: #{feedforward_crit.1} parent=0
    #allocation3 [shape = 'u8[512]{0}', space=vmem, size = 0x400, scoped, tag = 'output window, operand 0, single buffered']
    #allocation4 [shape = 's32[1]{0}', space=sflag, size = 0x4, scoped, tag = 'scoped memory for feedforward_crit.1']
    %14 = vsyncpa [#allocation4], 0
    // Predicated region
    $region2: #{feedforward_crit.1} parent=1 // pred_check
      _
    $region3: #{feedforward_crit.1} parent=1 // pred_check_branch
      %16 = sbr.rel (0) target = $region5
    $region4: #{feedforward_crit.1} parent=1 // pred_region
      _
    $region5: #{feedforward_crit.1} parent=1 // pred_fallthru
      _
    // Predicated region
    $region6: #{feedforward_crit.1} parent=1 // pred_check
      _
    $region7: #{feedforward_crit.1} parent=1 // pred_check_branch
      %18 = sbr.rel (0) target = $region9
    $region8: #{feedforward_crit.1} parent=1 // pred_region
      _
    $region9: #{feedforward_crit.1} parent=1 // pred_fallthru
      _
    // Predicated region
    $region10: #{feedforward_crit.1} parent=1 // pred_check
      _
    $region11: #{feedforward_crit.1} parent=1 // pred_check_branch
      %20 = sbr.rel (0) target = $region13
    $region12: #{feedforward_crit.1} parent=1 // pred_region
      _
    $region13: #{feedforward_crit.1} parent=1 // pred_fallthru
      _
    // Predicated region
    $region14: #{feedforward_crit.1} parent=1 // pred_check
      _
    $region15: #{feedforward_crit.1} parent=1 // pred_check_branch
      %22 = sbr.rel (0) target = $region17
    $region16: #{feedforward_crit.1} parent=1 // pred_region
      _
    $region17: #{feedforward_crit.1} parent=1 // pred_fallthru
      _
    // Predicated region
    $region18: #{feedforward_crit.1} parent=1 // pred_check
      _
    $region19: #{feedforward_crit.1} parent=1 // pred_check_branch
      %24 = sbr.rel (0) target = $region21
    $region20: #{feedforward_crit.1} parent=1 // pred_region
      _
    $region21: #{feedforward_crit.1} parent=1 // pred_fallthru
      _
    // Predicated region
    $region22: #{feedforward_crit.1} parent=1 // pred_check
      _
    $region23: #{feedforward_crit.1} parent=1 // pred_check_branch
      %26 = sbr.rel (0) target = $region25
    $region24: #{feedforward_crit.1} parent=1 // pred_region
      _
    $region25: #{feedforward_crit.1} parent=1 // pred_fallthru
      _
    // Predicated region
    $region26: #{feedforward_crit.1} parent=1 // pred_check
      _
    $region27: #{feedforward_crit.1} parent=1 // pred_check_branch
      %28 = sbr.rel (0) target = $region29
    $region28: #{feedforward_crit.1} parent=1 // pred_region
      _
    $region29: #{feedforward_crit.1} parent=1 // pred_fallthru
      _
    %v29 = vld [vmem:[%s0] sm:$0xff]
    %v30 = vld [vmem:[%s1] sm:$0xff]
    %v31 = vld [vmem:[%s1 + $0x8] sm:$0xff]
    %v32 = vld [vmem:[%s2] sm:$0x1]
    %v34 = vlaneseq
    %v35 = vshrl.u32 %v34, 7
    %v36 = vsub.s32 0, %v35
    %v37 = vrot.slane %v32, %v36
    %vm39 = vcmask 130048
    %v41 = vsel %vm39, %v29, 0
    %43 = vmatprep.subr.mxu0 0.0
    %44 = vmatpush1.msra.mxu0 %v30
    %45 = vmatprep.subr.mxu0 0.0
    %46 = vmatpush1.msra.mxu0 %v31
    %47 = vmatprep.subr.mxu0 0.0
    %48 = vmatpush1.msra.mxu0 0.0
    %49 = vmatprep.subr.mxu0 0.0
    %50 = vmatpush1.msra.mxu0 0.0
    %51 = vmatprep.subr.mxu0 0.0
    %52 = vmatpush1.msra.mxu0 0.0
    %53 = vmatprep.subr.mxu0 0.0
    %54 = vmatpush1.msra.mxu0 0.0
    %55 = vmatprep.subr.mxu0 0.0
    %56 = vmatpush1.msra.mxu0 0.0
    %57 = vmatprep.subr.mxu0 0.0
    %58 = vmatpush1.msra.mxu0 0.0
    %59 = vmatprep.subr.mxu0 0.0
    %60 = vmatpush1.msra.mxu0 0.0
    %61 = vmatprep.subr.mxu0 0.0
    %62 = vmatpush1.msra.mxu0 0.0
    %63 = vmatprep.subr.mxu0 0.0
    %64 = vmatpush1.msra.mxu0 0.0
    %65 = vmatprep.subr.mxu0 0.0
    %66 = vmatpush1.msra.mxu0 0.0
    %67 = vmatprep.subr.mxu0 0.0
    %68 = vmatpush1.msra.mxu0 0.0
    %69 = vmatprep.subr.mxu0 0.0
    %70 = vmatpush1.msra.mxu0 0.0
    %71 = vmatprep.subr.mxu0 0.0
    %72 = vmatpush1.msra.mxu0 0.0
    %73 = vmatprep.subr.mxu0 0.0
    %74 = vmatpush1.msra.mxu0 0.0
    %75 = vmatprep.subr.mxu0 0.0
    %76 = vmatpush1.msra.mxu0 0.0
    %77 = vmatprep.subr.mxu0 0.0
    %78 = vmatpush1.msra.mxu0 0.0
    %79 = vmatprep.subr.mxu0 0.0
    %80 = vmatpush1.msra.mxu0 0.0
    %81 = vmatprep.subr.mxu0 0.0
    %82 = vmatpush1.msra.mxu0 0.0
    %83 = vmatprep.subr.mxu0 0.0
    %84 = vmatpush1.msra.mxu0 0.0
    %85 = vmatprep.subr.mxu0 0.0
    %86 = vmatpush1.msra.mxu0 0.0
    %87 = vmatprep.subr.mxu0 0.0
    %88 = vmatpush1.msra.mxu0 0.0
    %89 = vmatprep.subr.mxu0 0.0
    %90 = vmatpush1.msra.mxu0 0.0
    %91 = vmatprep.subr.mxu0 0.0
    %92 = vmatpush1.msra.mxu0 0.0
    %93 = vmatprep.subr.mxu0 0.0
    %94 = vmatpush1.msra.mxu0 0.0
    %95 = vmatprep.subr.mxu0 0.0
    %96 = vmatpush1.msra.mxu0 0.0
    %97 = vmatprep.subr.mxu0 0.0
    %98 = vmatpush1.msra.mxu0 0.0
    %99 = vmatprep.subr.mxu0 0.0
    %100 = vmatpush1.msra.mxu0 0.0
    %101 = vmatprep.subr.mxu0 0.0
    %102 = vmatpush1.msra.mxu0 0.0
    %103 = vmatprep.subr.mxu0 0.0
    %104 = vmatpush1.msra.mxu0 0.0
    %105 = vmatprep.subr.mxu0 0.0
    %106 = vmatpush1.msra.mxu0 0.0
    %107 = vmatprep.mubr.f32.mxu0 0.0
    %108 = vmatmul.mubr.f32.gmra.mrb[0].mxu0 %v41
    %v109 = vpop.f32.mrb[0].mxu0
    %v110 = vadd.f32 %v37, %v109
    %v111 = vpop.f32.mrb[0].mxu0
    %112 = vdwg.mxu0
    %vm113 = vcmp.gt.f32.partialorder %v110, 0.0
    %v114 = vmul.f32 %v110, 0.01
    %v115 = vsel %vm113, %v110, %v114
    %v116 = vld [vmem:[%s3] sm:$0xff]
    %v117 = vld [vmem:[%s3 + $0x8] sm:$0xff]
    %v118 = vld [vmem:[%s3 + $0x10] sm:$0xff]
    %v119 = vld [vmem:[%s3 + $0x18] sm:$0xff]
    %v120 = vld [vmem:[%s3 + $0x20] sm:$0xff]
    %v121 = vld [vmem:[%s3 + $0x28] sm:$0xff]
    %v122 = vld [vmem:[%s3 + $0x30] sm:$0xff]
    %v123 = vld [vmem:[%s3 + $0x38] sm:$0xff]
    %v124 = vld [vmem:[%s3 + $0x40] sm:$0xff]
    %v125 = vld [vmem:[%s3 + $0x48] sm:$0xff]
    %v126 = vld [vmem:[%s3 + $0x50] sm:$0xff]
    %v127 = vld [vmem:[%s3 + $0x58] sm:$0xff]
    %v128 = vld [vmem:[%s3 + $0x60] sm:$0xff]
    %v129 = vld [vmem:[%s3 + $0x68] sm:$0xff]
    %v130 = vld [vmem:[%s3 + $0x70] sm:$0xff]
    %v131 = vld [vmem:[%s3 + $0x78] sm:$0xff]
    %v132 = vld [vmem:[%s4] sm:$0x1]
    %v134 = vlaneseq
    %v135 = vshrl.u32 %v134, 7
    %v136 = vsub.s32 0, %v135
    %v137 = vrot.slane %v132, %v136
    %139 = vmatprep.subr.mxu0 0.0
    %140 = vmatpush1.msra.mxu0 %v116
    %141 = vmatprep.subr.mxu0 0.0
    %142 = vmatpush1.msra.mxu0 %v117
    %143 = vmatprep.subr.mxu0 0.0
    %144 = vmatpush1.msra.mxu0 %v118
    %145 = vmatprep.subr.mxu0 0.0
    %146 = vmatpush1.msra.mxu0 %v119
    %147 = vmatprep.subr.mxu0 0.0
    %148 = vmatpush1.msra.mxu0 %v120
    %149 = vmatprep.subr.mxu0 0.0
    %150 = vmatpush1.msra.mxu0 %v121
    %151 = vmatprep.subr.mxu0 0.0
    %152 = vmatpush1.msra.mxu0 %v122
    %153 = vmatprep.subr.mxu0 0.0
    %154 = vmatpush1.msra.mxu0 %v123
    %155 = vmatprep.subr.mxu0 0.0
    %156 = vmatpush1.msra.mxu0 %v124
    %157 = vmatprep.subr.mxu0 0.0
    %158 = vmatpush1.msra.mxu0 %v125
    %159 = vmatprep.subr.mxu0 0.0
    %160 = vmatpush1.msra.mxu0 %v126
    %161 = vmatprep.subr.mxu0 0.0
    %162 = vmatpush1.msra.mxu0 %v127
    %163 = vmatprep.subr.mxu0 0.0
    %164 = vmatpush1.msra.mxu0 %v128
    %165 = vmatprep.subr.mxu0 0.0
    %166 = vmatpush1.msra.mxu0 %v129
    %167 = vmatprep.subr.mxu0 0.0
    %168 = vmatpush1.msra.mxu0 %v130
    %169 = vmatprep.subr.mxu0 0.0
    %170 = vmatpush1.msra.mxu0 %v131
    %171 = vmatprep.subr.mxu0 0.0
    %172 = vmatpush1.msra.mxu0 0.0
    %173 = vmatprep.subr.mxu0 0.0
    %174 = vmatpush1.msra.mxu0 0.0
    %175 = vmatprep.subr.mxu0 0.0
    %176 = vmatpush1.msra.mxu0 0.0
    %177 = vmatprep.subr.mxu0 0.0
    %178 = vmatpush1.msra.mxu0 0.0
    %179 = vmatprep.subr.mxu0 0.0
    %180 = vmatpush1.msra.mxu0 0.0
    %181 = vmatprep.subr.mxu0 0.0
    %182 = vmatpush1.msra.mxu0 0.0
    %183 = vmatprep.subr.mxu0 0.0
    %184 = vmatpush1.msra.mxu0 0.0
    %185 = vmatprep.subr.mxu0 0.0
    %186 = vmatpush1.msra.mxu0 0.0
    %187 = vmatprep.subr.mxu0 0.0
    %188 = vmatpush1.msra.mxu0 0.0
    %189 = vmatprep.subr.mxu0 0.0
    %190 = vmatpush1.msra.mxu0 0.0
    %191 = vmatprep.subr.mxu0 0.0
    %192 = vmatpush1.msra.mxu0 0.0
    %193 = vmatprep.subr.mxu0 0.0
    %194 = vmatpush1.msra.mxu0 0.0
    %195 = vmatprep.subr.mxu0 0.0
    %196 = vmatpush1.msra.mxu0 0.0
    %197 = vmatprep.subr.mxu0 0.0
    %198 = vmatpush1.msra.mxu0 0.0
    %199 = vmatprep.subr.mxu0 0.0
    %200 = vmatpush1.msra.mxu0 0.0
    %201 = vmatprep.subr.mxu0 0.0
    %202 = vmatpush1.msra.mxu0 0.0
    %203 = vmatprep.mubr.f32.mxu0 0.0
    %204 = vmatmul.mubr.f32.gmra.mrb[0].mxu0 %v115
    %v205 = vpop.f32.mrb[0].mxu0
    %v206 = vadd.f32 %v137, %v205
    %v207 = vpop.f32.mrb[0].mxu0
    %208 = vdwg.mxu0
    %vm209 = vcmp.gt.f32.partialorder %v206, 0.0
    %v210 = vmul.f32 %v206, 0.01
    %v211 = vsel %vm209, %v206, %v210
    %v212 = vld [vmem:[%s5] sm:$0x1]
    %v213 = vld [vmem:[#allocation2] sm:$0x1]
    %215 = vset.pattern.permute.xlu0 0
    %216 = vperm.xlu0 %215, %v213
    %v217 = vpop.permute.xlu0 %216
    %v219 = vlaneseq
    %v220 = vshrl.u32 %v219, 7
    %v221 = vsub.s32 0, %v220
    %v222 = vrot.slane %v217, %v221
    %223 = vmatprep.subr.mxu0 0.0
    %224 = vmatpush1.xpose.msra.mxu0 %v211
    %225 = vmatprep.subr.mxu0 0.0
    %226 = vmatpush1.xpose.msra.mxu0 0.0
    %227 = vmatprep.subr.mxu0 0.0
    %228 = vmatpush1.xpose.msra.mxu0 0.0
    %229 = vmatprep.subr.mxu0 0.0
    %230 = vmatpush1.xpose.msra.mxu0 0.0
    %231 = vmatprep.subr.mxu0 0.0
    %232 = vmatpush1.xpose.msra.mxu0 0.0
    %233 = vmatprep.subr.mxu0 0.0
    %234 = vmatpush1.xpose.msra.mxu0 0.0
    %235 = vmatprep.subr.mxu0 0.0
    %236 = vmatpush1.xpose.msra.mxu0 0.0
    %237 = vmatprep.subr.mxu0 0.0
    %238 = vmatpush1.xpose.msra.mxu0 0.0
    %239 = vmatprep.subr.mxu0 0.0
    %240 = vmatpush1.xpose.msra.mxu0 0.0
    %241 = vmatprep.subr.mxu0 0.0
    %242 = vmatpush1.xpose.msra.mxu0 0.0
    %243 = vmatprep.subr.mxu0 0.0
    %244 = vmatpush1.xpose.msra.mxu0 0.0
    %245 = vmatprep.subr.mxu0 0.0
    %246 = vmatpush1.xpose.msra.mxu0 0.0
    %247 = vmatprep.subr.mxu0 0.0
    %248 = vmatpush1.xpose.msra.mxu0 0.0
    %249 = vmatprep.subr.mxu0 0.0
    %250 = vmatpush1.xpose.msra.mxu0 0.0
    %251 = vmatprep.subr.mxu0 0.0
    %252 = vmatpush1.xpose.msra.mxu0 0.0
    %253 = vmatprep.subr.mxu0 0.0
    %254 = vmatpush1.xpose.msra.mxu0 0.0
    %255 = vmatprep.subr.mxu0 0.0
    %256 = vmatpush1.xpose.msra.mxu0 0.0
    %257 = vmatprep.subr.mxu0 0.0
    %258 = vmatpush1.xpose.msra.mxu0 0.0
    %259 = vmatprep.subr.mxu0 0.0
    %260 = vmatpush1.xpose.msra.mxu0 0.0
    %261 = vmatprep.subr.mxu0 0.0
    %262 = vmatpush1.xpose.msra.mxu0 0.0
    %263 = vmatprep.subr.mxu0 0.0
    %264 = vmatpush1.xpose.msra.mxu0 0.0
    %265 = vmatprep.subr.mxu0 0.0
    %266 = vmatpush1.xpose.msra.mxu0 0.0
    %267 = vmatprep.subr.mxu0 0.0
    %268 = vmatpush1.xpose.msra.mxu0 0.0
    %269 = vmatprep.subr.mxu0 0.0
    %270 = vmatpush1.xpose.msra.mxu0 0.0
    %271 = vmatprep.subr.mxu0 0.0
    %272 = vmatpush1.xpose.msra.mxu0 0.0
    %273 = vmatprep.subr.mxu0 0.0
    %274 = vmatpush1.xpose.msra.mxu0 0.0
    %275 = vmatprep.subr.mxu0 0.0
    %276 = vmatpush1.xpose.msra.mxu0 0.0
    %277 = vmatprep.subr.mxu0 0.0
    %278 = vmatpush1.xpose.msra.mxu0 0.0
    %279 = vmatprep.subr.mxu0 0.0
    %280 = vmatpush1.xpose.msra.mxu0 0.0
    %281 = vmatprep.subr.mxu0 0.0
    %282 = vmatpush1.xpose.msra.mxu0 0.0
    %283 = vmatprep.subr.mxu0 0.0
    %284 = vmatpush1.xpose.msra.mxu0 0.0
    %285 = vmatprep.subr.mxu0 0.0
    %286 = vmatpush1.xpose.msra.mxu0 0.0
    %287 = vmatprep.mubr.f32.mxu0 0.0
    %288 = vmatmul.mubr.f32.gmra.mrb[0].mxu0 %v212
    %v289 = vpop.f32.mrb[0].mxu0
    %v290 = vadd.f32 %v222, %v289
    %v291 = vpop.f32.mrb[0].mxu0
    %292 = vdwg.mxu0
    %vm293 = vcmask 57344
    %294 = vst.msk [vmem:[#allocation3] sm:$0x1] %vm293, %v290
    // Predicated region
    $region30: #{feedforward_crit.1} parent=1 // pred_check
      _
    $region31: #{feedforward_crit.1} parent=1 // pred_check_branch
      %296 = sbr.rel (0) target = $region33
    $region32: #{feedforward_crit.1} parent=1 // pred_region
      %s298 = ssub.s32 16, 16
      %299 = vsyncadd [#allocation4], %s298
      %s301 = sshll.u32 [#allocation3], 4
      %s302 = int_to_ptr.vmem [resolvable:$true] %s301
      %304 = dma.vmem_to_hbm [thread:$0]  %s302, 16, %s7, [#allocation4]
    $region33: #{feedforward_crit.1} parent=1 // pred_fallthru
      _
    // Predicated region
    $region34: #{feedforward_crit.1} parent=1 // pred_check
      _
    $region35: #{feedforward_crit.1} parent=1 // pred_check_branch
      %306 = sbr.rel (0) target = $region37
    $region36: #{feedforward_crit.1} parent=1 // pred_region
      %307 = dma.done [#allocation4], 16
    $region37: #{feedforward_crit.1} parent=1 // pred_fallthru
      _
    %308 = vsyncpa [#allocation4], 1

</llo_original>
